<compile_context>
chip_gen: v6e
topology: v6e:2x2x1
jax: 0.10.0
libtpu: 0.0.40
codegen_flags: <defaults>
</compile_context>

<pallas_src>
import jax
import jax.numpy as jnp
from jax.experimental import pallas as pl
from jax.experimental.pallas import tpu as pltpu

_ROWS_PER_PACKED_ROW = 64                       # batch rows per packed row
_IN, _OUT = 2, 2                                # nn.Linear(2, 2)
_PACK_IN = _ROWS_PER_PACKED_ROW * _IN           # 128 input lanes / packed row
_PACK_OUT = _ROWS_PER_PACKED_ROW * 2 * _OUT     # 256 output lanes / packed row


def _linear_cat_kernel(x_ref, m_ref, b_ref, o_ref):
    # x_ref: (tb, 128)   lane-dense packed input tile
    # m_ref: (128, 256)  constant kron(I_64, [W; W]^T)   -- resident across grid
    # b_ref: (1, 256)    tiled bias [b0,b1,b0,b1] * 64   -- resident across grid
    # o_ref: (tb, 256)   lane-dense packed output tile (already cat([y, y], 1))
    y = jnp.dot(x_ref[...], m_ref[...], preferred_element_type=jnp.float32)
    o_ref[...] = (y + b_ref[...]).astype(o_ref.dtype)


def linear_cat(x, weight, bias, *, tb=1024):
    """out = cat([x @ weight.T + bias, x @ weight.T + bias], axis=1)."""
    B, in_feat = x.shape
    out_feat = weight.shape[0]
    assert in_feat == _IN and out_feat == _OUT
    dtype = x.dtype

    # ---- fold Linear + cat into one constant operator (wrapper, once) ------
    # Per batch row: out_row(4) = x_row(2) @ Wcat^T + bcat,
    #   Wcat = [[W]; [W]] (4, 2), bcat = [b, b] (4,)
    # Packed over 64 rows: M = kron(I_64, Wcat^T) (128, 256); bvec = tile(bcat, 64).
    wcat_t = jnp.concatenate([weight, weight], axis=0).T.astype(dtype)      # (2, 4)
    m = jnp.kron(jnp.eye(_ROWS_PER_PACKED_ROW, dtype=dtype), wcat_t)        # (128, 256)
    bvec = jnp.tile(jnp.concatenate([bias, bias]).astype(dtype),
                    _ROWS_PER_PACKED_ROW).reshape(1, _PACK_OUT)             # (1, 256)

    # ---- zero-copy lane-dense repack of the batch ---------------------------
    pad = (-B) % _ROWS_PER_PACKED_ROW
    x_in = jnp.pad(x, ((0, pad), (0, 0))) if pad else x
    bp = (B + pad) // _ROWS_PER_PACKED_ROW
    x_packed = x_in.reshape(bp, _PACK_IN)                                   # (Bp, 128)

    # Batch tile in packed rows (~1.5 KiB useful bytes each): default 1024 rows
    # (~64K batch rows, ~1.5 MiB / step).  Full batch if it is smaller.
    tb = min(tb, bp)
    if bp > tb:
        tb = max(8, (tb // 8) * 8)   # partial tiles: keep block rows a multiple of 8
    grid = (pl.cdiv(bp, tb),)

    out_packed = pl.pallas_call(
        _linear_cat_kernel,
        out_shape=jax.ShapeDtypeStruct((bp, _PACK_OUT), dtype),
        grid=grid,
        in_specs=[
            pl.BlockSpec((tb, _PACK_IN), lambda i: (i, 0)),         # x: tiled over batch
            pl.BlockSpec((_PACK_IN, _PACK_OUT), lambda i: (0, 0)),  # M: resident
            pl.BlockSpec((1, _PACK_OUT), lambda i: (0, 0)),         # bias: resident
        ],
        out_specs=pl.BlockSpec((tb, _PACK_OUT), lambda i: (i, 0)),
        compiler_params=pltpu.CompilerParams(
            dimension_semantics=("parallel",),
        ),
    )(x_packed, m, bvec)

    out = out_packed.reshape(bp * _ROWS_PER_PACKED_ROW, 2 * out_feat)
    return out[:B] if pad else out


if __name__ == "__main__":
    key = jax.random.PRNGKey(0)
    kx, kw, kb = jax.random.split(key, 3)

    # Shapes implied by the module: x = torch.randn(2, 2), nn.Linear(2, 2).
    B, IN, OUT = 2, 2, 2
    x = jax.random.normal(kx, (B, IN), dtype=jnp.float32)
    weight = jax.random.normal(kw, (OUT, IN), dtype=jnp.float32) * 0.5
    bias = jax.random.normal(kb, (OUT,), dtype=jnp.float32) * 0.1

    out = linear_cat(x, weight, bias)
    jax.block_until_ready(out)

    y_ref = x @ weight.T + bias
    ref = jnp.concatenate([y_ref, y_ref], axis=1)
    assert out.shape == (B, 2 * OUT)
    assert jnp.allclose(out, ref, atol=1e-5, rtol=1e-5)

    # Extra check: batch not a multiple of the 64-row packing (exercises the
    # zero-pad path and multi-row packed tiles).
    B2 = 200
    x2 = jax.random.normal(kx, (B2, IN), dtype=jnp.float32)
    out2 = linear_cat(x2, weight, bias)
    jax.block_until_ready(out2)
    y2 = x2 @ weight.T + bias
    ref2 = jnp.concatenate([y2, y2], axis=1)
    assert out2.shape == (B2, 2 * OUT)
    assert jnp.allclose(out2, ref2, atol=1e-5, rtol=1e-5)

    print("KERNEL_OK")
</pallas_src>

<mosaic_0001>
module attributes {stable_mosaic.version = 11 : i64} {
  func.func @_linear_cat_kernel(%arg0: i32, %arg1: memref<1x128xf32, #tpu.memory_space<vmem>>, %arg2: memref<128x256xf32, #tpu.memory_space<vmem>>, %arg3: memref<1x256xf32, #tpu.memory_space<vmem>>, %arg4: memref<1x256xf32, #tpu.memory_space<vmem>>) attributes {dimension_semantics = [#tpu.dimension_semantics<parallel>], iteration_bounds = array<i64: 1>, scalar_prefetch = 0 : i64, scratch_operands = 0 : i64, tpu.core_type = #tpu.core_type<tc>, window_params = [{transform_indices = @transform_0, window_bounds = array<i64: 1, 128>}, {pipeline_mode = #tpu.pipeline_mode<synchronous>, transform_indices = @transform_1, window_bounds = array<i64: 128, 256>}, {pipeline_mode = #tpu.pipeline_mode<synchronous>, transform_indices = @transform_2, window_bounds = array<i64: 1, 256>}, {transform_indices = @transform_3, window_bounds = array<i64: 1, 256>}]} {
    %c0 = arith.constant 0 : index
    %c0_0 = arith.constant 0 : index
    %0 = vector.load %arg1[%c0, %c0_0] : memref<1x128xf32, #tpu.memory_space<vmem>>, vector<1x128xf32>
    %c0_1 = arith.constant 0 : index
    %c0_2 = arith.constant 0 : index
    %1 = vector.load %arg2[%c0_1, %c0_2] : memref<128x256xf32, #tpu.memory_space<vmem>>, vector<128x256xf32>
    %cst = arith.constant dense<0.000000e+00> : vector<1x256xf32>
    %2 = tpu.matmul %0, %1, %cst {dimension_numbers = #tpu.dot_dimension_numbers<[1], [0], [0], [1], [0, 0, 1, 1], [], []>} : vector<1x128xf32>, vector<128x256xf32>, vector<1x256xf32> -> vector<1x256xf32>
    %c0_3 = arith.constant 0 : index
    %c0_4 = arith.constant 0 : index
    %3 = vector.load %arg3[%c0_3, %c0_4] : memref<1x256xf32, #tpu.memory_space<vmem>>, vector<1x256xf32>
    %4 = arith.addf %2, %3 : vector<1x256xf32>
    %c0_5 = arith.constant 0 : index
    %c0_6 = arith.constant 0 : index
    %5 = vector.load %arg4[%c0_5, %c0_6] : memref<1x256xf32, #tpu.memory_space<vmem>>, vector<1x256xf32>
    tpu.vector_store %arg4[%c0_5, %c0_6], %4 {strides = array<i32>} : memref<1x256xf32, #tpu.memory_space<vmem>>, vector<1x256xf32>,
    return
  }
  func.func @transform_0(%arg0: i32) -> (i32, i32) {
    %c0_i32 = arith.constant 0 : i32
    %c0_i32_0 = arith.constant 0 : i32
    return %arg0, %c0_i32 : i32, i32
  }
  func.func @transform_1(%arg0: i32) -> (i32, i32) {
    %c0_i32 = arith.constant 0 : i32
    %c0_i32_0 = arith.constant 0 : i32
    %c0_i32_1 = arith.constant 0 : i32
    return %c0_i32, %c0_i32_0 : i32, i32
  }
  func.func @transform_2(%arg0: i32) -> (i32, i32) {
    %c0_i32 = arith.constant 0 : i32
    %c0_i32_0 = arith.constant 0 : i32
    %c0_i32_1 = arith.constant 0 : i32
    return %c0_i32, %c0_i32_0 : i32, i32
  }
  func.func @transform_3(%arg0: i32) -> (i32, i32) {
    %c0_i32 = arith.constant 0 : i32
    %c0_i32_0 = arith.constant 0 : i32
    return %arg0, %c0_i32 : i32, i32
  }
}

</mosaic_0001>

<llo_original>
// kernel: tpu_custom_call.1
$region0: #{tpu_custom_call.1}
  #allocation0 [shape = 'u32[]', space=smem, size = 0x4, offset = 0x4, fixed_abs, tag = 'smem constant byte address 0x4 - core index']
  #allocation1 [shape = 'u32[144,128]{1,0:T(1,128)}', space=vmem, size = 0x12000, scoped, tag = 'internal scratch']
  %s0 = inlined_call_operand.hbm [shape: f32[1,128], index: 0, kind: input, shape index: {}]
  %s1 = inlined_call_operand.hbm [shape: f32[128,256], index: 1, kind: input, shape index: {}]
  %s2 = inlined_call_operand.vmem [shape: f32[1,256], index: 2, kind: input, shape index: {}]
  %s3 = inlined_call_operand.hbm [shape: f32[1,256], index: 3, kind: output, shape index: {}]
  %s4 = sld [smem:[#allocation0]]
  $region30: #{tpu_custom_call.1} parent=0
    _
  %s6 = ssub.s32 1, %s4
  %s7 = scalar_select 0, %s6, %s4
  $region1: #{tpu_custom_call.1} parent=0
    #allocation2 [shape = 'u8[512]{0}', space=vmem, size = 0x400, scoped, tag = 'input window, operand 0, single buffered']
    #allocation3 [shape = 's32[1]{0}', space=sflag, size = 0x4, scoped, tag = 'scoped memory for tpu_custom_call.1']
    #allocation4 [shape = 's32[1]{0}', space=sflag, size = 0x4, scoped, tag = 'scoped memory for tpu_custom_call.1']
    #allocation5 [shape = 'u8[131072]{0}', space=vmem, size = 0x20000, scoped, tag = 'input window, operand 1, single buffered']
    #allocation6 [shape = 's32[1]{0}', space=sflag, size = 0x4, scoped, tag = 'scoped memory for tpu_custom_call.1']
    #allocation7 [shape = 'u8[1024]{0}', space=vmem, size = 0x400, scoped, tag = 'output window, operand 0, single buffered']
    %8 = vsyncpa [#allocation3], 0
    %9 = vsyncpa [#allocation6], 0
    %10 = vsyncpa [#allocation4], 0
    // Predicated region
    $region2: #{tpu_custom_call.1} parent=1 // pred_check
      _
    $region3: #{tpu_custom_call.1} parent=1 // pred_check_branch
      %12 = sbr.rel (0) target = $region5
    $region4: #{tpu_custom_call.1} parent=1 // pred_region
      %s14 = ssub.s32 16, 16
      %15 = vsyncadd [#allocation3], %s14
      %s17 = sshll.u32 [#allocation2], 4
      %s18 = int_to_ptr.vmem [resolvable:$true] %s17
      %20 = dma.hbm_to_vmem [thread:$0]  %s0, 16, %s18, [#allocation3]
    $region5: #{tpu_custom_call.1} parent=1 // pred_fallthru
      _
    // Predicated region
    $region6: #{tpu_custom_call.1} parent=1 // pred_check
      _
    $region7: #{tpu_custom_call.1} parent=1 // pred_check_branch
      %22 = sbr.rel (0) target = $region9
    $region8: #{tpu_custom_call.1} parent=1 // pred_region
      %s24 = ssub.s32 4096, 4096
      %25 = vsyncadd [#allocation6], %s24
      %s26 = sshll.u32 [#allocation5], 4
      %s27 = int_to_ptr.vmem [resolvable:$true] %s26
      %32 = dma.hbm_to_vmem [thread:$0]  %s1, 4096, %s27, [#allocation6], 256, 256, 16
    $region9: #{tpu_custom_call.1} parent=1 // pred_fallthru
      _
    // Predicated region
    $region10: #{tpu_custom_call.1} parent=1 // pred_check
      _
    $region11: #{tpu_custom_call.1} parent=1 // pred_check_branch
      %34 = sbr.rel (0) target = $region13
    $region12: #{tpu_custom_call.1} parent=1 // pred_region
      _
    $region13: #{tpu_custom_call.1} parent=1 // pred_fallthru
      _
    // Predicated region
    $region14: #{tpu_custom_call.1} parent=1 // pred_check
      _
    $region15: #{tpu_custom_call.1} parent=1 // pred_check_branch
      %36 = sbr.rel (0) target = $region17
    $region16: #{tpu_custom_call.1} parent=1 // pred_region
      %37 = dma.done [#allocation3], 16
    $region17: #{tpu_custom_call.1} parent=1 // pred_fallthru
      _
    // Predicated region
    $region18: #{tpu_custom_call.1} parent=1 // pred_check
      _
    $region19: #{tpu_custom_call.1} parent=1 // pred_check_branch
      %39 = sbr.rel (0) target = $region21
    $region20: #{tpu_custom_call.1} parent=1 // pred_region
      %40 = dma.done [#allocation6], 4096
    $region21: #{tpu_custom_call.1} parent=1 // pred_fallthru
      _
    %v41 = vld [vmem:[#allocation2] sm:$0x1]
    %v42 = vld [vmem:[#allocation5] sm:$0xff]
    %v43 = vld [vmem:[#allocation5 + $0x8] sm:$0xff]
    %v44 = vld [vmem:[#allocation5 + $0x10] sm:$0xff]
    %v45 = vld [vmem:[#allocation5 + $0x18] sm:$0xff]
    %v46 = vld [vmem:[#allocation5 + $0x20] sm:$0xff]
    %v47 = vld [vmem:[#allocation5 + $0x28] sm:$0xff]
    %v48 = vld [vmem:[#allocation5 + $0x30] sm:$0xff]
    %v49 = vld [vmem:[#allocation5 + $0x38] sm:$0xff]
    %v50 = vld [vmem:[#allocation5 + $0x40] sm:$0xff]
    %v51 = vld [vmem:[#allocation5 + $0x48] sm:$0xff]
    %v52 = vld [vmem:[#allocation5 + $0x50] sm:$0xff]
    %v53 = vld [vmem:[#allocation5 + $0x58] sm:$0xff]
    %v54 = vld [vmem:[#allocation5 + $0x60] sm:$0xff]
    %v55 = vld [vmem:[#allocation5 + $0x68] sm:$0xff]
    %v56 = vld [vmem:[#allocation5 + $0x70] sm:$0xff]
    %v57 = vld [vmem:[#allocation5 + $0x78] sm:$0xff]
    %v58 = vld [vmem:[#allocation5 + $0x80] sm:$0xff]
    %v59 = vld [vmem:[#allocation5 + $0x88] sm:$0xff]
    %v60 = vld [vmem:[#allocation5 + $0x90] sm:$0xff]
    %v61 = vld [vmem:[#allocation5 + $0x98] sm:$0xff]
    %v62 = vld [vmem:[#allocation5 + $0xa0] sm:$0xff]
    %v63 = vld [vmem:[#allocation5 + $0xa8] sm:$0xff]
    %v64 = vld [vmem:[#allocation5 + $0xb0] sm:$0xff]
    %v65 = vld [vmem:[#allocation5 + $0xb8] sm:$0xff]
    %v66 = vld [vmem:[#allocation5 + $0xc0] sm:$0xff]
    %v67 = vld [vmem:[#allocation5 + $0xc8] sm:$0xff]
    %v68 = vld [vmem:[#allocation5 + $0xd0] sm:$0xff]
    %v69 = vld [vmem:[#allocation5 + $0xd8] sm:$0xff]
    %v70 = vld [vmem:[#allocation5 + $0xe0] sm:$0xff]
    %v71 = vld [vmem:[#allocation5 + $0xe8] sm:$0xff]
    %v72 = vld [vmem:[#allocation5 + $0xf0] sm:$0xff]
    %v73 = vld [vmem:[#allocation5 + $0xf8] sm:$0xff]
    %v74 = vld [vmem:[%s2] sm:$0x3]
    %v76 = vlaneseq
    %v77 = vshrl.u32 %v76, 7
    %v78 = vsub.s32 0, %v77
    %v79 = vrot.slane %v74, %v78
    %v80 = vlaneseq
    %v81 = vshrl.u32 %v80, 7
    %v82 = vsub.s32 1, %v81
    %v83 = vrot.slane %v74, %v82
    %86 = vmatprep.subr.mxu0 %v73
    %87 = vmatpush1.msra.mxu0 %v72
    %88 = vmatprep.subr.mxu0 %v71
    %89 = vmatpush1.msra.mxu0 %v70
    %90 = vmatprep.subr.mxu0 %v69
    %91 = vmatpush1.msra.mxu0 %v68
    %92 = vmatprep.subr.mxu0 %v67
    %93 = vmatpush1.msra.mxu0 %v66
    %94 = vmatprep.subr.mxu0 %v65
    %95 = vmatpush1.msra.mxu0 %v64
    %96 = vmatprep.subr.mxu0 %v63
    %97 = vmatpush1.msra.mxu0 %v62
    %98 = vmatprep.subr.mxu0 %v61
    %99 = vmatpush1.msra.mxu0 %v60
    %100 = vmatprep.subr.mxu0 %v59
    %101 = vmatpush1.msra.mxu0 %v58
    %102 = vmatprep.subr.mxu0 %v57
    %103 = vmatpush1.msra.mxu0 %v56
    %104 = vmatprep.subr.mxu0 %v55
    %105 = vmatpush1.msra.mxu0 %v54
    %106 = vmatprep.subr.mxu0 %v53
    %107 = vmatpush1.msra.mxu0 %v52
    %108 = vmatprep.subr.mxu0 %v51
    %109 = vmatpush1.msra.mxu0 %v50
    %110 = vmatprep.subr.mxu0 %v49
    %111 = vmatpush1.msra.mxu0 %v48
    %112 = vmatprep.subr.mxu0 %v47
    %113 = vmatpush1.msra.mxu0 %v46
    %114 = vmatprep.subr.mxu0 %v45
    %115 = vmatpush1.msra.mxu0 %v44
    %116 = vmatprep.subr.mxu0 %v43
    %117 = vmatpush1.msra.mxu0 %v42
    %118 = vmatprep.subr.mxu0 0.0
    %119 = vmatpush2.msra.mxu0 0.0
    %120 = vmatprep.subr.mxu0 0.0
    %121 = vmatpush2.msra.mxu0 0.0
    %122 = vmatprep.subr.mxu0 0.0
    %123 = vmatpush2.msra.mxu0 0.0
    %124 = vmatprep.subr.mxu0 0.0
    %125 = vmatpush2.msra.mxu0 0.0
    %126 = vmatprep.subr.mxu0 0.0
    %127 = vmatpush2.msra.mxu0 0.0
    %128 = vmatprep.subr.mxu0 0.0
    %129 = vmatpush2.msra.mxu0 0.0
    %130 = vmatprep.subr.mxu0 0.0
    %131 = vmatpush2.msra.mxu0 0.0
    %132 = vmatprep.subr.mxu0 0.0
    %133 = vmatpush2.msra.mxu0 0.0
    %134 = vmatprep.subr.mxu0 0.0
    %135 = vmatpush2.msra.mxu0 0.0
    %136 = vmatprep.subr.mxu0 0.0
    %137 = vmatpush2.msra.mxu0 0.0
    %138 = vmatprep.subr.mxu0 0.0
    %139 = vmatpush2.msra.mxu0 0.0
    %140 = vmatprep.subr.mxu0 0.0
    %141 = vmatpush2.msra.mxu0 0.0
    %142 = vmatprep.subr.mxu0 0.0
    %143 = vmatpush2.msra.mxu0 0.0
    %144 = vmatprep.subr.mxu0 0.0
    %145 = vmatpush2.msra.mxu0 0.0
    %146 = vmatprep.subr.mxu0 0.0
    %147 = vmatpush2.msra.mxu0 0.0
    %148 = vmatprep.subr.mxu0 0.0
    %149 = vmatpush2.msra.mxu0 0.0
    %150 = vmatprep.mubr.f32.mxu0 0.0
    %151 = vmatmul.mubr.f32.gmra.mxu0 %v41
    %v152 = vpop.f32.mrf.mxu0
    %v153 = vadd.f32 %v79, %v152
    %v154 = vpop.f32.mrf.mxu0
    %v155 = vadd.f32 %v83, %v154
    %156 = vdwg.mxu0
    %v159 = vcombine.low %v153, %v155
    %v161 = vunpack.c.l.s4 1966171168
    %v162 = vunpack.c.0.s8 %v161
    %v163 = vlaneseq
    %v164 = vshrl.u32 %v163, 7
    %v165 = vsub.s32 %v162, %v164
    %v166 = vrot.slane %v159, %v165
    %v168 = vunpack.c.l.s4 1966171168
    %v169 = vunpack.c.0.s8 %v168
    %v170 = vlaneseq
    %v171 = vshrl.u32 %v170, 7
    %v172 = vsub.s32 %v169, %v171
    %v173 = vrot.slane %v166, %v172
    %v175 = vlaneseq
    %vm176 = vcmp.ge.s32.totalorder %v175, 0
    %vm177 = vcmp.lt.s32.totalorder %v175, 256
    %vm178 = vmand %vm176, %vm177
    %179 = vst.msk [vmem:[#allocation7] sm:$0x3] %vm178, %v173
    // Predicated region
    $region22: #{tpu_custom_call.1} parent=1 // pred_check
      _
    $region23: #{tpu_custom_call.1} parent=1 // pred_check_branch
      %181 = sbr.rel (0) target = $region25
    $region24: #{tpu_custom_call.1} parent=1 // pred_region
      %s183 = ssub.s32 32, 32
      %184 = vsyncadd [#allocation4], %s183
      %s186 = sshll.u32 [#allocation7], 4
      %s187 = int_to_ptr.vmem [resolvable:$true] %s186
      %189 = dma.vmem_to_hbm [thread:$0]  %s187, 32, %s3, [#allocation4]
    $region25: #{tpu_custom_call.1} parent=1 // pred_fallthru
      _
    // Predicated region
    $region26: #{tpu_custom_call.1} parent=1 // pred_check
      _
    $region27: #{tpu_custom_call.1} parent=1 // pred_check_branch
      %191 = sbr.rel (0) target = $region29
    $region28: #{tpu_custom_call.1} parent=1 // pred_region
      %192 = dma.done [#allocation4], 32
    $region29: #{tpu_custom_call.1} parent=1 // pred_fallthru
      _
    %193 = vsyncpa [#allocation3], 1
    %194 = vsyncpa [#allocation6], 1
    %195 = vsyncpa [#allocation4], 1

</llo_original>
